<compile_context>
chip_gen: v7x
topology: tpu7x:2x2x1
jax: 0.10.0
libtpu: 0.0.40
codegen_flags: <defaults>
</compile_context>

<pallas_src>
import functools

import jax
import jax.numpy as jnp
from jax.experimental import pallas as pl
from jax.experimental.pallas import tpu as pltpu

MIN_STD = 0.01
LANE = 128


def _round_up(n, m):
    return ((n + m - 1) // m) * m


def _pad2(a, shape, dtype):
    a = jnp.asarray(a, jnp.float32)
    a = jnp.pad(a, [(0, shape[0] - a.shape[0]), (0, shape[1] - a.shape[1])])
    return a.astype(dtype)


def _bias_row(b, width):
    b = jnp.asarray(b, jnp.float32).reshape(-1)
    return jnp.pad(b, (0, width - b.shape[0]))


def _default_vmem_limit():
    """Scoped-VMEM limit per generation: ~96 MiB on 128-MiB parts (v4/v5e/v6e),
    a conservative 32 MiB otherwise (v7x has only 64 MiB physical VMEM per TC)."""
    try:
        kind = jax.devices()[0].device_kind.lower()
    except Exception:
        return 32 * 1024 * 1024
    if ("v4" in kind) or ("v5" in kind) or ("v6" in kind):
        return 96 * 1024 * 1024
    return 32 * 1024 * 1024


def _pick_batch_tile(B, Sp, Hp, vmem_limit):
    """Pick batch_tile so every MXU matmul is tall (rows_per_tile ~512-2048) while
    the per-step working set stays well under the scoped VMEM limit (v7x-safe)."""
    # ~4 live f32 (rows, Hp) intermediates + double-buffered bf16 token input / row.
    bytes_per_row = 4 * Hp * 4 + 2 * 2 * LANE
    budget = vmem_limit // 2
    max_rows = max(8 * Sp, budget // bytes_per_row)
    target_rows = min(max_rows, 2048)
    bt = _round_up(max(1, target_rows // Sp), 8)
    bt = max(8, min(bt, _round_up(B, 8)))          # don't tile past the padded batch
    # Prefer >= 2 grid steps so megacore sharding (v7x, 2 TCs) has work for both cores.
    b8 = _round_up(B, 8)
    if b8 >= 16 and b8 // bt < 2:
        bt = _round_up((b8 + 1) // 2, 8)
    return bt


def latent_encoder_kernel(
    tok_ref,
    w0_ref, w1_ref, w2_ref, wp_ref, wm_ref, wl_ref,
    bh_ref, blat_ref,
    out_ref,
    *, seq_len, seq_pad, batch_tile,
):
    bf16 = jnp.bfloat16
    f32 = jnp.float32

    # Packed biases (f32): rows of the (8, width) slabs.
    b0 = bh_ref[0:1, :]
    b1 = bh_ref[1:2, :]
    b2 = bh_ref[2:3, :]
    bp = bh_ref[3:4, :]
    bm = blat_ref[0:1, :]
    bl = blat_ref[1:2, :]

    # ---- BatchMLP (num_layers=3): Linear+ReLU, Linear+ReLU, Linear ---------------
    # Layer 0 is one fused matmul over concat([x, y], -1) (concat done in wrapper).
    tok = tok_ref[...]                                             # (rows, in_dim) bf16
    h = jnp.dot(tok, w0_ref[...], preferred_element_type=f32) + b0
    h = jnp.maximum(h, 0.0)
    h = jnp.dot(h.astype(bf16), w1_ref[...], preferred_element_type=f32) + b1
    h = jnp.maximum(h, 0.0)
    h = jnp.dot(h.astype(bf16), w2_ref[...], preferred_element_type=f32) + b2

    # ---- mean over the sequence dim: sublane reduce; reshape is a layout no-op
    # because seq_pad % 8 == 0. Padded sequence rows are masked before the sum. ----
    hp = h.shape[-1]
    hr = h.reshape(batch_tile, seq_pad, hp)
    if seq_pad != seq_len:
        sidx = jax.lax.broadcasted_iota(jnp.int32, hr.shape, 1)
        hr = jnp.where(sidx < seq_len, hr, 0.0)
    mean_repr = jnp.sum(hr, axis=1) * (1.0 / seq_len)              # (batch_tile, Hp) f32

    # ---- penultimate layer + mean / log_var heads ---------------------------------
    pen = jnp.dot(mean_repr.astype(bf16), wp_ref[...], preferred_element_type=f32) + bp
    pen = jnp.maximum(pen, 0.0).astype(bf16)
    mean = jnp.dot(pen, wm_ref[...], preferred_element_type=f32) + bm
    log_var = jnp.dot(pen, wl_ref[...], preferred_element_type=f32) + bl
    sigma = MIN_STD + (1.0 - MIN_STD) * jax.nn.sigmoid(0.5 * log_var)

    # ---- lane-dense packed output: [mean | log_var | sigma], Lp lanes each --------
    lp = mean.shape[-1]
    out_ref[:, 0 * lp:1 * lp] = mean
    out_ref[:, 1 * lp:2 * lp] = log_var
    out_ref[:, 2 * lp:3 * lp] = sigma


def latent_encoder_forward(x, y, params, *, batch_tile=None):
    """x: (B, S, x_dim), y: (B, S, y_dim). Returns (mean, sigma, log_var)."""
    B, S, x_dim = x.shape
    y_dim = y.shape[-1]
    in_dim = x_dim + y_dim
    hidden_dim = params["w1"].shape[0]
    latent_dim = params["wm"].shape[1]

    f32 = jnp.float32
    bf16 = jnp.bfloat16

    Hp = _round_up(hidden_dim, LANE)
    Lp = _round_up(latent_dim, LANE)
    Sp = _round_up(S, 8)            # sublane-aligned sequence length

    vmem_limit = _default_vmem_limit()
    if batch_tile is None:
        batch_tile = _pick_batch_tile(B, Sp, Hp, vmem_limit)
    assert batch_tile % 8 == 0
    Bp = _round_up(B, batch_tile)
    rows_per_tile = batch_tile * Sp
    grid = (Bp // batch_tile,)

    # ---- weights: lane-padded, bf16 for the MXU; biases packed, kept f32 ----------
    w0 = _pad2(params["w0"], (in_dim, Hp), bf16)
    w1 = _pad2(params["w1"], (Hp, Hp), bf16)
    w2 = _pad2(params["w2"], (Hp, Hp), bf16)
    wp = _pad2(params["wp"], (Hp, Hp), bf16)
    wm = _pad2(params["wm"], (Hp, Lp), bf16)
    wl = _pad2(params["wl"], (Hp, Lp), bf16)
    bias_h = jnp.stack(
        [_bias_row(params["b0"], Hp), _bias_row(params["b1"], Hp),
         _bias_row(params["b2"], Hp), _bias_row(params["bp"], Hp)]
        + [jnp.zeros((Hp,), f32)] * 4)                             # (8, Hp)
    bias_l = jnp.stack(
        [_bias_row(params["bm"], Lp), _bias_row(params["bl"], Lp)]
        + [jnp.zeros((Lp,), f32)] * 6)                             # (8, Lp)

    # ---- tokens: concat([x, y], -1) once, pad batch/sequence with zeros, bf16 -----
    tok = jnp.concatenate([jnp.asarray(x, f32), jnp.asarray(y, f32)], axis=-1)
    tok = jnp.pad(tok, ((0, Bp - B), (0, Sp - S), (0, 0)))
    tok = tok.reshape(Bp * Sp, in_dim).astype(bf16)

    weights = (w0, w1, w2, wp, wm, wl, bias_h, bias_l)

    tokens = Bp * Sp
    flops = (2 * tokens * (in_dim * Hp + 2 * Hp * Hp)
             + 2 * Bp * (Hp * Hp + 2 * Hp * Lp))
    bytes_accessed = (2 * tokens * in_dim
                      + sum(int(w.size) * w.dtype.itemsize for w in weights)
                      + 4 * Bp * 3 * Lp)

    fn = pl.pallas_call(
        functools.partial(latent_encoder_kernel, seq_len=S, seq_pad=Sp,
                          batch_tile=batch_tile),
        out_shape=jax.ShapeDtypeStruct((Bp, 3 * Lp), f32),
        grid=grid,
        in_specs=[pl.BlockSpec((rows_per_tile, in_dim), lambda i: (i, 0))]
                 + [pl.BlockSpec(w.shape, lambda i: (0, 0)) for w in weights],
        out_specs=pl.BlockSpec((batch_tile, 3 * Lp), lambda i: (i, 0)),
        compiler_params=pltpu.CompilerParams(
            dimension_semantics=("parallel",),
            vmem_limit_bytes=vmem_limit,
        ),
        cost_estimate=pl.CostEstimate(
            flops=flops, transcendentals=Bp * Lp, bytes_accessed=bytes_accessed),
    )
    packed = fn(tok, *weights)

    mean = packed[:B, 0:latent_dim]
    log_var = packed[:B, Lp:Lp + latent_dim]
    sigma = packed[:B, 2 * Lp:2 * Lp + latent_dim]
    # dist = Normal(mean, sigma); module returns (dist, log_var)
    return mean, sigma, log_var


def init_params(key, input_dim, hidden_dim, latent_dim):
    ks = jax.random.split(key, 7)

    def lin(k, fan_in, fan_out):
        kw, kb = jax.random.split(k)
        w = jax.random.normal(kw, (fan_in, fan_out), jnp.float32) * (1.0 / jnp.sqrt(fan_in))
        b = jax.random.normal(kb, (1, fan_out), jnp.float32) * 0.01
        return w, b

    p = {}
    p["w0"], p["b0"] = lin(ks[0], input_dim, hidden_dim)   # BatchMLP.initial
    p["w1"], p["b1"] = lin(ks[1], hidden_dim, hidden_dim)  # BatchMLP.encoder[0]
    p["w2"], p["b2"] = lin(ks[2], hidden_dim, hidden_dim)  # BatchMLP.final
    p["wp"], p["bp"] = lin(ks[3], hidden_dim, hidden_dim)  # _penultimate_layer
    p["wm"], p["bm"] = lin(ks[4], hidden_dim, latent_dim)  # _mean
    p["wl"], p["bl"] = lin(ks[5], hidden_dim, latent_dim)  # _log_var
    return p


def reference_forward(x, y, p):
    xin = jnp.concatenate([x, y], axis=-1)
    h = jax.nn.relu(xin @ p["w0"] + p["b0"])
    h = jax.nn.relu(h @ p["w1"] + p["b1"])
    h = h @ p["w2"] + p["b2"]
    mr = h.mean(axis=1)
    pen = jax.nn.relu(mr @ p["wp"] + p["bp"])
    mean = pen @ p["wm"] + p["bm"]
    log_var = pen @ p["wl"] + p["bl"]
    sigma = MIN_STD + (1.0 - MIN_STD) * jax.nn.sigmoid(0.5 * log_var)
    return mean, sigma, log_var


if __name__ == "__main__":
    B, S = 2, 8
    x_dim, y_dim = 3, 1
    hidden_dim, latent_dim = 32, 32
    input_dim = x_dim + y_dim

    key = jax.random.PRNGKey(0)
    kx, ky, kp = jax.random.split(key, 3)
    x = jax.random.normal(kx, (B, S, x_dim), jnp.float32)
    y = jax.random.normal(ky, (B, S, y_dim), jnp.float32)
    params = init_params(kp, input_dim, hidden_dim, latent_dim)

    mean, sigma, log_var = latent_encoder_forward(x, y, params)
    jax.block_until_ready((mean, sigma, log_var))

    mean_r, sigma_r, log_var_r = reference_forward(x, y, params)
    # bf16 MXU inputs (f32 accumulation) -> tolerance loosened vs the pure-f32 version.
    assert jnp.allclose(mean, mean_r, atol=3e-2, rtol=3e-2)
    assert jnp.allclose(sigma, sigma_r, atol=3e-2, rtol=3e-2)
    assert jnp.allclose(log_var, log_var_r, atol=3e-2, rtol=3e-2)

    print("KERNEL_OK")
</pallas_src>

<mosaic_0001>
module attributes {stable_mosaic.version = 11 : i64} {
  func.func @latent_encoder_kernel(%arg0: i32, %arg1: memref<64x4xbf16, #tpu.memory_space<vmem>>, %arg2: memref<4x128xbf16, #tpu.memory_space<vmem>>, %arg3: memref<128x128xbf16, #tpu.memory_space<vmem>>, %arg4: memref<128x128xbf16, #tpu.memory_space<vmem>>, %arg5: memref<128x128xbf16, #tpu.memory_space<vmem>>, %arg6: memref<128x128xbf16, #tpu.memory_space<vmem>>, %arg7: memref<128x128xbf16, #tpu.memory_space<vmem>>, %arg8: memref<8x128xf32, #tpu.memory_space<vmem>>, %arg9: memref<8x128xf32, #tpu.memory_space<vmem>>, %arg10: memref<8x384xf32, #tpu.memory_space<vmem>>) attributes {dimension_semantics = [#tpu.dimension_semantics<parallel>], iteration_bounds = array<i64: 1>, scalar_prefetch = 0 : i64, scratch_operands = 0 : i64, tpu.core_type = #tpu.core_type<tc>, window_params = [{transform_indices = @transform_0, window_bounds = array<i64: 64, 4>}, {pipeline_mode = #tpu.pipeline_mode<synchronous>, transform_indices = @transform_1, window_bounds = array<i64: 4, 128>}, {pipeline_mode = #tpu.pipeline_mode<synchronous>, transform_indices = @transform_2, window_bounds = array<i64: 128, 128>}, {pipeline_mode = #tpu.pipeline_mode<synchronous>, transform_indices = @transform_3, window_bounds = array<i64: 128, 128>}, {pipeline_mode = #tpu.pipeline_mode<synchronous>, transform_indices = @transform_4, window_bounds = array<i64: 128, 128>}, {pipeline_mode = #tpu.pipeline_mode<synchronous>, transform_indices = @transform_5, window_bounds = array<i64: 128, 128>}, {pipeline_mode = #tpu.pipeline_mode<synchronous>, transform_indices = @transform_6, window_bounds = array<i64: 128, 128>}, {pipeline_mode = #tpu.pipeline_mode<synchronous>, transform_indices = @transform_7, window_bounds = array<i64: 8, 128>}, {pipeline_mode = #tpu.pipeline_mode<synchronous>, transform_indices = @transform_8, window_bounds = array<i64: 8, 128>}, {transform_indices = @transform_9, window_bounds = array<i64: 8, 384>}]} {
    %c0 = arith.constant 0 : index
    %c0_0 = arith.constant 0 : index
    %0 = vector.load %arg8[%c0, %c0_0] : memref<8x128xf32, #tpu.memory_space<vmem>>, vector<1x128xf32>
    %c1 = arith.constant 1 : index
    %c0_1 = arith.constant 0 : index
    %1 = vector.load %arg8[%c1, %c0_1] : memref<8x128xf32, #tpu.memory_space<vmem>>, vector<1x128xf32>
    %c2 = arith.constant 2 : index
    %c0_2 = arith.constant 0 : index
    %2 = vector.load %arg8[%c2, %c0_2] : memref<8x128xf32, #tpu.memory_space<vmem>>, vector<1x128xf32>
    %c3 = arith.constant 3 : index
    %c0_3 = arith.constant 0 : index
    %3 = vector.load %arg8[%c3, %c0_3] : memref<8x128xf32, #tpu.memory_space<vmem>>, vector<1x128xf32>
    %c0_4 = arith.constant 0 : index
    %c0_5 = arith.constant 0 : index
    %4 = vector.load %arg9[%c0_4, %c0_5] : memref<8x128xf32, #tpu.memory_space<vmem>>, vector<1x128xf32>
    %c1_6 = arith.constant 1 : index
    %c0_7 = arith.constant 0 : index
    %5 = vector.load %arg9[%c1_6, %c0_7] : memref<8x128xf32, #tpu.memory_space<vmem>>, vector<1x128xf32>
    %c0_8 = arith.constant 0 : index
    %c0_9 = arith.constant 0 : index
    %6 = vector.load %arg1[%c0_8, %c0_9] : memref<64x4xbf16, #tpu.memory_space<vmem>>, vector<64x4xbf16>
    %c0_10 = arith.constant 0 : index
    %c0_11 = arith.constant 0 : index
    %7 = vector.load %arg2[%c0_10, %c0_11] : memref<4x128xbf16, #tpu.memory_space<vmem>>, vector<4x128xbf16>
    %cst = arith.constant dense<0.000000e+00> : vector<64x128xf32>
    %8 = tpu.matmul %6, %7, %cst {dimension_numbers = #tpu.dot_dimension_numbers<[1], [0], [0], [1], [0, 0, 1, 1], [], []>} : vector<64x4xbf16>, vector<4x128xbf16>, vector<64x128xf32> -> vector<64x128xf32>
    %9 = vector.broadcast %0 : vector<1x128xf32> to vector<64x128xf32>
    %10 = arith.addf %8, %9 : vector<64x128xf32>
    %cst_12 = arith.constant 0.000000e+00 : f32
    %11 = vector.broadcast %cst_12 : f32 to vector<64x128xf32>
    %12 = arith.maximumf %10, %11 : vector<64x128xf32>
    %13 = arith.truncf %12 : vector<64x128xf32> to vector<64x128xbf16>
    %c0_13 = arith.constant 0 : index
    %c0_14 = arith.constant 0 : index
    %14 = vector.load %arg3[%c0_13, %c0_14] : memref<128x128xbf16, #tpu.memory_space<vmem>>, vector<128x128xbf16>
    %cst_15 = arith.constant dense<0.000000e+00> : vector<64x128xf32>
    %15 = tpu.matmul %13, %14, %cst_15 {dimension_numbers = #tpu.dot_dimension_numbers<[1], [0], [0], [1], [0, 0, 1, 1], [], []>} : vector<64x128xbf16>, vector<128x128xbf16>, vector<64x128xf32> -> vector<64x128xf32>
    %16 = vector.broadcast %1 : vector<1x128xf32> to vector<64x128xf32>
    %17 = arith.addf %15, %16 : vector<64x128xf32>
    %cst_16 = arith.constant 0.000000e+00 : f32
    %18 = vector.broadcast %cst_16 : f32 to vector<64x128xf32>
    %19 = arith.maximumf %17, %18 : vector<64x128xf32>
    %20 = arith.truncf %19 : vector<64x128xf32> to vector<64x128xbf16>
    %c0_17 = arith.constant 0 : index
    %c0_18 = arith.constant 0 : index
    %21 = vector.load %arg4[%c0_17, %c0_18] : memref<128x128xbf16, #tpu.memory_space<vmem>>, vector<128x128xbf16>
    %cst_19 = arith.constant dense<0.000000e+00> : vector<64x128xf32>
    %22 = tpu.matmul %20, %21, %cst_19 {dimension_numbers = #tpu.dot_dimension_numbers<[1], [0], [0], [1], [0, 0, 1, 1], [], []>} : vector<64x128xbf16>, vector<128x128xbf16>, vector<64x128xf32> -> vector<64x128xf32>
    %23 = vector.broadcast %2 : vector<1x128xf32> to vector<64x128xf32>
    %24 = arith.addf %22, %23 : vector<64x128xf32>
    %25 = vector.shape_cast %24 : vector<64x128xf32> to vector<8x8x128xf32>
    %cst_20 = arith.constant dense<0.000000e+00> : vector<8x128xf32>
    %26 = vector.multi_reduction <add>, %25, %cst_20 [1] : vector<8x8x128xf32> to vector<8x128xf32>
    %cst_21 = arith.constant 1.250000e-01 : f32
    %27 = vector.broadcast %cst_21 : f32 to vector<8x128xf32>
    %28 = arith.mulf %26, %27 : vector<8x128xf32>
    %29 = arith.truncf %28 : vector<8x128xf32> to vector<8x128xbf16>
    %c0_22 = arith.constant 0 : index
    %c0_23 = arith.constant 0 : index
    %30 = vector.load %arg5[%c0_22, %c0_23] : memref<128x128xbf16, #tpu.memory_space<vmem>>, vector<128x128xbf16>
    %cst_24 = arith.constant dense<0.000000e+00> : vector<8x128xf32>
    %31 = tpu.matmul %29, %30, %cst_24 {dimension_numbers = #tpu.dot_dimension_numbers<[1], [0], [0], [1], [0, 0, 1, 1], [], []>} : vector<8x128xbf16>, vector<128x128xbf16>, vector<8x128xf32> -> vector<8x128xf32>
    %32 = vector.broadcast %3 : vector<1x128xf32> to vector<8x128xf32>
    %33 = arith.addf %31, %32 : vector<8x128xf32>
    %cst_25 = arith.constant 0.000000e+00 : f32
    %34 = vector.broadcast %cst_25 : f32 to vector<8x128xf32>
    %35 = arith.maximumf %33, %34 : vector<8x128xf32>
    %36 = arith.truncf %35 : vector<8x128xf32> to vector<8x128xbf16>
    %c0_26 = arith.constant 0 : index
    %c0_27 = arith.constant 0 : index
    %37 = vector.load %arg6[%c0_26, %c0_27] : memref<128x128xbf16, #tpu.memory_space<vmem>>, vector<128x128xbf16>
    %cst_28 = arith.constant dense<0.000000e+00> : vector<8x128xf32>
    %38 = tpu.matmul %36, %37, %cst_28 {dimension_numbers = #tpu.dot_dimension_numbers<[1], [0], [0], [1], [0, 0, 1, 1], [], []>} : vector<8x128xbf16>, vector<128x128xbf16>, vector<8x128xf32> -> vector<8x128xf32>
    %39 = vector.broadcast %4 : vector<1x128xf32> to vector<8x128xf32>
    %40 = arith.addf %38, %39 : vector<8x128xf32>
    %c0_29 = arith.constant 0 : index
    %c0_30 = arith.constant 0 : index
    %41 = vector.load %arg7[%c0_29, %c0_30] : memref<128x128xbf16, #tpu.memory_space<vmem>>, vector<128x128xbf16>
    %cst_31 = arith.constant dense<0.000000e+00> : vector<8x128xf32>
    %42 = tpu.matmul %36, %41, %cst_31 {dimension_numbers = #tpu.dot_dimension_numbers<[1], [0], [0], [1], [0, 0, 1, 1], [], []>} : vector<8x128xbf16>, vector<128x128xbf16>, vector<8x128xf32> -> vector<8x128xf32>
    %43 = vector.broadcast %5 : vector<1x128xf32> to vector<8x128xf32>
    %44 = arith.addf %42, %43 : vector<8x128xf32>
    %cst_32 = arith.constant 5.000000e-01 : f32
    %45 = vector.broadcast %cst_32 : f32 to vector<8x128xf32>
    %46 = arith.mulf %45, %44 : vector<8x128xf32>
    %47 = arith.negf %46 : vector<8x128xf32>
    %48 = math.exp %47 : vector<8x128xf32>
    %cst_33 = arith.constant 1.000000e+00 : f32
    %49 = vector.broadcast %cst_33 : f32 to vector<8x128xf32>
    %50 = arith.addf %49, %48 : vector<8x128xf32>
    %51 = arith.divf %49, %50 : vector<8x128xf32>
    %cst_34 = arith.constant 9.900000e-01 : f32
    %52 = vector.broadcast %cst_34 : f32 to vector<8x128xf32>
    %53 = arith.mulf %52, %51 : vector<8x128xf32>
    %cst_35 = arith.constant 0.00999999977 : f32
    %54 = vector.broadcast %cst_35 : f32 to vector<8x128xf32>
    %55 = arith.addf %54, %53 : vector<8x128xf32>
    %c0_36 = arith.constant 0 : index
    %c0_37 = arith.constant 0 : index
    %56 = vector.load %arg10[%c0_36, %c0_37] : memref<8x384xf32, #tpu.memory_space<vmem>>, vector<8x128xf32>
    tpu.vector_store %arg10[%c0_36, %c0_37], %40 {strides = array<i32>} : memref<8x384xf32, #tpu.memory_space<vmem>>, vector<8x128xf32>,
    %c0_38 = arith.constant 0 : index
    %c128 = arith.constant 128 : index
    %57 = vector.load %arg10[%c0_38, %c128] : memref<8x384xf32, #tpu.memory_space<vmem>>, vector<8x128xf32>
    tpu.vector_store %arg10[%c0_38, %c128], %44 {strides = array<i32>} : memref<8x384xf32, #tpu.memory_space<vmem>>, vector<8x128xf32>,
    %c0_39 = arith.constant 0 : index
    %c256 = arith.constant 256 : index
    %58 = vector.load %arg10[%c0_39, %c256] : memref<8x384xf32, #tpu.memory_space<vmem>>, vector<8x128xf32>
    tpu.vector_store %arg10[%c0_39, %c256], %55 {strides = array<i32>} : memref<8x384xf32, #tpu.memory_space<vmem>>, vector<8x128xf32>,
    return
  }
  func.func @transform_0(%arg0: i32) -> (i32, i32) {
    %c0_i32 = arith.constant 0 : i32
    %c0_i32_0 = arith.constant 0 : i32
    return %arg0, %c0_i32 : i32, i32
  }
  func.func @transform_1(%arg0: i32) -> (i32, i32) {
    %c0_i32 = arith.constant 0 : i32
    %c0_i32_0 = arith.constant 0 : i32
    %c0_i32_1 = arith.constant 0 : i32
    return %c0_i32, %c0_i32_0 : i32, i32
  }
  func.func @transform_2(%arg0: i32) -> (i32, i32) {
    %c0_i32 = arith.constant 0 : i32
    %c0_i32_0 = arith.constant 0 : i32
    %c0_i32_1 = arith.constant 0 : i32
    return %c0_i32, %c0_i32_0 : i32, i32
  }
  func.func @transform_3(%arg0: i32) -> (i32, i32) {
    %c0_i32 = arith.constant 0 : i32
    %c0_i32_0 = arith.constant 0 : i32
    %c0_i32_1 = arith.constant 0 : i32
    return %c0_i32, %c0_i32_0 : i32, i32
  }
  func.func @transform_4(%arg0: i32) -> (i32, i32) {
    %c0_i32 = arith.constant 0 : i32
    %c0_i32_0 = arith.constant 0 : i32
    %c0_i32_1 = arith.constant 0 : i32
    return %c0_i32, %c0_i32_0 : i32, i32
  }
  func.func @transform_5(%arg0: i32) -> (i32, i32) {
    %c0_i32 = arith.constant 0 : i32
    %c0_i32_0 = arith.constant 0 : i32
    %c0_i32_1 = arith.constant 0 : i32
    return %c0_i32, %c0_i32_0 : i32, i32
  }
  func.func @transform_6(%arg0: i32) -> (i32, i32) {
    %c0_i32 = arith.constant 0 : i32
    %c0_i32_0 = arith.constant 0 : i32
    %c0_i32_1 = arith.constant 0 : i32
    return %c0_i32, %c0_i32_0 : i32, i32
  }
  func.func @transform_7(%arg0: i32) -> (i32, i32) {
    %c0_i32 = arith.constant 0 : i32
    %c0_i32_0 = arith.constant 0 : i32
    %c0_i32_1 = arith.constant 0 : i32
    return %c0_i32, %c0_i32_0 : i32, i32
  }
  func.func @transform_8(%arg0: i32) -> (i32, i32) {
    %c0_i32 = arith.constant 0 : i32
    %c0_i32_0 = arith.constant 0 : i32
    %c0_i32_1 = arith.constant 0 : i32
    return %c0_i32, %c0_i32_0 : i32, i32
  }
  func.func @transform_9(%arg0: i32) -> (i32, i32) {
    %c0_i32 = arith.constant 0 : i32
    %c0_i32_0 = arith.constant 0 : i32
    return %arg0, %c0_i32 : i32, i32
  }
}

</mosaic_0001>

<llo_original>
// kernel: tpu_custom_call.1
$region0: #{tpu_custom_call.1}
  #allocation0 [shape = 'u32[]', space=smem, size = 0x4, offset = 0x4, fixed_abs, tag = 'smem constant byte address 0x4 - core index']
  #allocation1 [shape = 'u32[144,128]{1,0:T(1,128)}', space=vmem, size = 0x12000, scoped, tag = 'internal scratch']
  %s0 = inlined_call_operand.vmem [shape: bf16[64,4], index: 0, kind: input, shape index: {}]
  %s1 = inlined_call_operand.vmem [shape: bf16[4,128], index: 1, kind: input, shape index: {}]
  %s2 = inlined_call_operand.hbm [shape: bf16[128,128], index: 2, kind: input, shape index: {}]
  %s3 = inlined_call_operand.hbm [shape: bf16[128,128], index: 3, kind: input, shape index: {}]
  %s4 = inlined_call_operand.hbm [shape: bf16[128,128], index: 4, kind: input, shape index: {}]
  %s5 = inlined_call_operand.hbm [shape: bf16[128,128], index: 5, kind: input, shape index: {}]
  %s6 = inlined_call_operand.hbm [shape: bf16[128,128], index: 6, kind: input, shape index: {}]
  %s7 = inlined_call_operand.vmem [shape: f32[8,128], index: 7, kind: input, shape index: {}]
  %s8 = inlined_call_operand.vmem [shape: f32[8,128], index: 8, kind: input, shape index: {}]
  %s9 = inlined_call_operand.hbm [shape: f32[8,384], index: 9, kind: output, shape index: {}]
  %s10 = sld [smem:[#allocation0]]
  $region66: #{tpu_custom_call.1} parent=0
    _
  %s12 = ssub.s32 1, %s10
  %s13 = scalar_select 0, %s12, %s10
  $region1: #{tpu_custom_call.1} parent=0
    #allocation2 [shape = 'u8[32768]{0}', space=vmem, size = 0x8000, scoped, tag = 'input window, operand 2, single buffered']
    #allocation3 [shape = 's32[1]{0}', space=sflag, size = 0x4, scoped, tag = 'scoped memory for tpu_custom_call.1']
    #allocation4 [shape = 's32[1]{0}', space=sflag, size = 0x4, scoped, tag = 'scoped memory for tpu_custom_call.1']
    #allocation5 [shape = 'u8[32768]{0}', space=vmem, size = 0x8000, scoped, tag = 'input window, operand 3, single buffered']
    #allocation6 [shape = 's32[1]{0}', space=sflag, size = 0x4, scoped, tag = 'scoped memory for tpu_custom_call.1']
    #allocation7 [shape = 'u8[32768]{0}', space=vmem, size = 0x8000, scoped, tag = 'input window, operand 4, single buffered']
    #allocation8 [shape = 'u8[32768]{0}', space=vmem, size = 0x8000, scoped, tag = 'input window, operand 5, single buffered']
    #allocation9 [shape = 's32[1]{0}', space=sflag, size = 0x4, scoped, tag = 'scoped memory for tpu_custom_call.1']
    #allocation10 [shape = 'u8[32768]{0}', space=vmem, size = 0x8000, scoped, tag = 'input window, operand 6, single buffered']
    #allocation11 [shape = 'u8[12288]{0}', space=vmem, size = 0x3000, scoped, tag = 'output window, operand 0, single buffered']
    %14 = vsyncpa [#allocation3], 0
    %15 = vsyncpa [#allocation6], 0
    %16 = vsyncpa [#allocation9], 0
    %17 = vsyncpa [#allocation4], 0
    // Predicated region
    $region2: #{tpu_custom_call.1} parent=1 // pred_check
      _
    $region3: #{tpu_custom_call.1} parent=1 // pred_check_branch
      %19 = sbr.rel (0) target = $region5
    $region4: #{tpu_custom_call.1} parent=1 // pred_region
      _
    $region5: #{tpu_custom_call.1} parent=1 // pred_fallthru
      _
    // Predicated region
    $region6: #{tpu_custom_call.1} parent=1 // pred_check
      _
    $region7: #{tpu_custom_call.1} parent=1 // pred_check_branch
      %21 = sbr.rel (0) target = $region9
    $region8: #{tpu_custom_call.1} parent=1 // pred_region
      _
    $region9: #{tpu_custom_call.1} parent=1 // pred_fallthru
      _
    // Predicated region
    $region10: #{tpu_custom_call.1} parent=1 // pred_check
      _
    $region11: #{tpu_custom_call.1} parent=1 // pred_check_branch
      %23 = sbr.rel (0) target = $region13
    $region12: #{tpu_custom_call.1} parent=1 // pred_region
      %s25 = ssub.s32 1024, 1024
      %26 = vsyncadd [#allocation3], %s25
      %s27 = sshll.u32 [#allocation2], 4
      %s28 = int_to_ptr.vmem [resolvable:$true] %s27
      %33 = dma.hbm_to_vmem [thread:$0]  %s2, 1024, %s28, [#allocation3], 64, 64, 4
    $region13: #{tpu_custom_call.1} parent=1 // pred_fallthru
      _
    // Predicated region
    $region14: #{tpu_custom_call.1} parent=1 // pred_check
      _
    $region15: #{tpu_custom_call.1} parent=1 // pred_check_branch
      %35 = sbr.rel (0) target = $region17
    $region16: #{tpu_custom_call.1} parent=1 // pred_region
      %s37 = ssub.s32 1024, 1024
      %38 = vsyncadd [#allocation6], %s37
      %s39 = sshll.u32 [#allocation5], 4
      %s40 = int_to_ptr.vmem [resolvable:$true] %s39
      %45 = dma.hbm_to_vmem [thread:$0]  %s3, 1024, %s40, [#allocation6], 64, 64, 4
    $region17: #{tpu_custom_call.1} parent=1 // pred_fallthru
      _
    // Predicated region
    $region18: #{tpu_custom_call.1} parent=1 // pred_check
      _
    $region19: #{tpu_custom_call.1} parent=1 // pred_check_branch
      %47 = sbr.rel (0) target = $region21
    $region20: #{tpu_custom_call.1} parent=1 // pred_region
      %s49 = ssub.s32 1024, 1024
      %50 = vsyncadd [#allocation6], %s49
      %s51 = sshll.u32 [#allocation7], 4
      %s52 = int_to_ptr.vmem [resolvable:$true] %s51
      %57 = dma.hbm_to_vmem [thread:$0]  %s4, 1024, %s52, [#allocation6], 64, 64, 4
    $region21: #{tpu_custom_call.1} parent=1 // pred_fallthru
      _
    // Predicated region
    $region22: #{tpu_custom_call.1} parent=1 // pred_check
      _
    $region23: #{tpu_custom_call.1} parent=1 // pred_check_branch
      %59 = sbr.rel (0) target = $region25
    $region24: #{tpu_custom_call.1} parent=1 // pred_region
      %s61 = ssub.s32 1024, 1024
      %62 = vsyncadd [#allocation9], %s61
      %s63 = sshll.u32 [#allocation8], 4
      %s64 = int_to_ptr.vmem [resolvable:$true] %s63
      %69 = dma.hbm_to_vmem [thread:$0]  %s5, 1024, %s64, [#allocation9], 64, 64, 4
    $region25: #{tpu_custom_call.1} parent=1 // pred_fallthru
      _
    // Predicated region
    $region26: #{tpu_custom_call.1} parent=1 // pred_check
      _
    $region27: #{tpu_custom_call.1} parent=1 // pred_check_branch
      %71 = sbr.rel (0) target = $region29
    $region28: #{tpu_custom_call.1} parent=1 // pred_region
      %s73 = ssub.s32 1024, 1024
      %74 = vsyncadd [#allocation9], %s73
      %s75 = sshll.u32 [#allocation10], 4
      %s76 = int_to_ptr.vmem [resolvable:$true] %s75
      %81 = dma.hbm_to_vmem [thread:$0]  %s6, 1024, %s76, [#allocation9], 64, 64, 4
    $region29: #{tpu_custom_call.1} parent=1 // pred_fallthru
      _
    // Predicated region
    $region30: #{tpu_custom_call.1} parent=1 // pred_check
      _
    $region31: #{tpu_custom_call.1} parent=1 // pred_check_branch
      %83 = sbr.rel (0) target = $region33
    $region32: #{tpu_custom_call.1} parent=1 // pred_region
      _
    $region33: #{tpu_custom_call.1} parent=1 // pred_fallthru
      _
    // Predicated region
    $region34: #{tpu_custom_call.1} parent=1 // pred_check
      _
    $region35: #{tpu_custom_call.1} parent=1 // pred_check_branch
      %85 = sbr.rel (0) target = $region37
    $region36: #{tpu_custom_call.1} parent=1 // pred_region
      _
    $region37: #{tpu_custom_call.1} parent=1 // pred_fallthru
      _
    // Predicated region
    $region38: #{tpu_custom_call.1} parent=1 // pred_check
      _
    $region39: #{tpu_custom_call.1} parent=1 // pred_check_branch
      %87 = sbr.rel (0) target = $region41
    $region40: #{tpu_custom_call.1} parent=1 // pred_region
      %88 = dma.done [#allocation3], 1024
    $region41: #{tpu_custom_call.1} parent=1 // pred_fallthru
      _
    // Predicated region
    $region42: #{tpu_custom_call.1} parent=1 // pred_check
      _
    $region43: #{tpu_custom_call.1} parent=1 // pred_check_branch
      %90 = sbr.rel (0) target = $region45
    $region44: #{tpu_custom_call.1} parent=1 // pred_region
      %91 = dma.done [#allocation6], 1024
    $region45: #{tpu_custom_call.1} parent=1 // pred_fallthru
      _
    // Predicated region
    $region46: #{tpu_custom_call.1} parent=1 // pred_check
      _
    $region47: #{tpu_custom_call.1} parent=1 // pred_check_branch
      %93 = sbr.rel (0) target = $region49
    $region48: #{tpu_custom_call.1} parent=1 // pred_region
      %94 = dma.done [#allocation6], 1024
    $region49: #{tpu_custom_call.1} parent=1 // pred_fallthru
      _
    // Predicated region
    $region50: #{tpu_custom_call.1} parent=1 // pred_check
      _
    $region51: #{tpu_custom_call.1} parent=1 // pred_check_branch
      %96 = sbr.rel (0) target = $region53
    $region52: #{tpu_custom_call.1} parent=1 // pred_region
      %97 = dma.done [#allocation9], 1024
    $region53: #{tpu_custom_call.1} parent=1 // pred_fallthru
      _
    // Predicated region
    $region54: #{tpu_custom_call.1} parent=1 // pred_check
      _
    $region55: #{tpu_custom_call.1} parent=1 // pred_check_branch
      %99 = sbr.rel (0) target = $region57
    $region56: #{tpu_custom_call.1} parent=1 // pred_region
      %100 = dma.done [#allocation9], 1024
    $region57: #{tpu_custom_call.1} parent=1 // pred_fallthru
      _
    %v102 = vld [vmem:[%s7] sm:$0x1]
    %v103 = vld [vmem:[%s7 + $0x1] sm:$0x1]
    %v104 = vld [vmem:[%s7 + $0x2] sm:$0x1]
    %v105 = vld [vmem:[%s7 + $0x3] sm:$0x1]
    %v106 = vld [vmem:[%s8] sm:$0x1]
    %v107 = vld [vmem:[%s8 + $0x1] sm:$0x1]
    %v108 = vld [vmem:[%s0] sm:$0xf]
    %v109 = vld [vmem:[%s0 + $0x4] sm:$0xf]
    %v110 = vld [vmem:[%s0 + $0x8] sm:$0xf]
    %v111 = vld [vmem:[%s0 + $0xc] sm:$0xf]
    %v112 = vld [vmem:[%s0 + $0x10] sm:$0xf]
    %v113 = vld [vmem:[%s0 + $0x14] sm:$0xf]
    %v114 = vld [vmem:[%s0 + $0x18] sm:$0xf]
    %v115 = vld [vmem:[%s0 + $0x1c] sm:$0xf]
    %v116 = vld [vmem:[%s1] sm:$0x3]
    %v117 = vlaneseq
    %v118 = vshrl.u32 %v117, 7
    %v119 = vsub.s32 0, %v118
    %v120 = vrot.slane %v102, %v119
    %v129 = vunpack.c.l.b16 %v108
    %v130 = vunpack.c.l.b16 %v109
    %v131 = vunpack.c.l.b16 %v110
    %v132 = vunpack.c.l.b16 %v111
    %v133 = vunpack.c.l.b16 %v112
    %v134 = vunpack.c.l.b16 %v113
    %v135 = vunpack.c.l.b16 %v114
    %v136 = vunpack.c.l.b16 %v115
    %v137 = vpack.c.b16 %v130, %v129
    %v138 = vpack.c.b16 %v132, %v131
    %v139 = vpack.c.b16 %v134, %v133
    %v140 = vpack.c.b16 %v136, %v135
    %vm141 = vcmask 31744
    %v143 = vsel %vm141, %v137, 0
    %v146 = vsel %vm141, %v138, 0
    %v149 = vsel %vm141, %v139, 0
    %v152 = vsel %vm141, %v140, 0
    %vm154 = vcmask 1041408
    %v156 = vsel %vm154, %v116, 0
    %158 = vmatprep.subr.bf16.mxu0 0
    %159 = vmatpush1.bf16.msra.mxu0 %v156
    %160 = vmatprep.subr.bf16.mxu0 0
    %161 = vmatpush1.bf16.msra.mxu0 0
    %162 = vmatprep.subr.bf16.mxu0 0
    %163 = vmatpush1.bf16.msra.mxu0 0
    %164 = vmatprep.subr.bf16.mxu0 0
    %165 = vmatpush1.bf16.msra.mxu0 0
    %166 = vmatprep.subr.bf16.mxu0 0
    %167 = vmatpush1.bf16.msra.mxu0 0
    %168 = vmatprep.subr.bf16.mxu0 0
    %169 = vmatpush1.bf16.msra.mxu0 0
    %170 = vmatprep.subr.bf16.mxu0 0
    %171 = vmatpush1.bf16.msra.mxu0 0
    %172 = vmatprep.subr.bf16.mxu0 0
    %173 = vmatpush1.bf16.msra.mxu0 0
    %174 = vmatprep.subr.bf16.mxu0 0
    %175 = vmatpush1.bf16.msra.mxu0 0
    %176 = vmatprep.subr.bf16.mxu0 0
    %177 = vmatpush1.bf16.msra.mxu0 0
    %178 = vmatprep.subr.bf16.mxu0 0
    %179 = vmatpush1.bf16.msra.mxu0 0
    %180 = vmatprep.subr.bf16.mxu0 0
    %181 = vmatpush1.bf16.msra.mxu0 0
    %182 = vmatprep.subr.bf16.mxu0 0
    %183 = vmatpush1.bf16.msra.mxu0 0
    %184 = vmatprep.subr.bf16.mxu0 0
    %185 = vmatpush1.bf16.msra.mxu0 0
    %186 = vmatprep.subr.bf16.mxu0 0
    %187 = vmatpush1.bf16.msra.mxu0 0
    %188 = vmatprep.subr.bf16.mxu0 0
    %189 = vmatpush1.bf16.msra.mxu0 0
    %190 = vmatprep.mubr.bf16.mxu0 0
    %191 = vmatmul.mubr.bf16.gmra.mrb[0].mxu0 %v143
    %v192 = vpop.f32.mrb[0].mxu0
    %v193 = vadd.f32 %v120, %v192
    %v194 = vpop.f32.mrb[0].mxu0
    %v195 = vpop.f32.mrb[0].mxu0
    %v196 = vadd.f32 %v120, %v195
    %v197 = vpop.f32.mrb[0].mxu0
    %198 = vmatprep.mubr.bf16.mxu0 0
    %199 = vmatmul.mubr.bf16.gmra.mrb[0].mxu0 %v146
    %v200 = vpop.f32.mrb[0].mxu0
    %v201 = vadd.f32 %v120, %v200
    %v202 = vpop.f32.mrb[0].mxu0
    %v203 = vpop.f32.mrb[0].mxu0
    %v204 = vadd.f32 %v120, %v203
    %v205 = vpop.f32.mrb[0].mxu0
    %206 = vmatprep.mubr.bf16.mxu0 0
    %207 = vmatmul.mubr.bf16.gmra.mrb[0].mxu0 %v149
    %v208 = vpop.f32.mrb[0].mxu0
    %v209 = vadd.f32 %v120, %v208
    %v210 = vpop.f32.mrb[0].mxu0
    %v211 = vpop.f32.mrb[0].mxu0
    %v212 = vadd.f32 %v120, %v211
    %v213 = vpop.f32.mrb[0].mxu0
    %214 = vmatprep.mubr.bf16.mxu0 0
    %215 = vmatmul.mubr.bf16.gmra.mrb[0].mxu0 %v152
    %v216 = vpop.f32.mrb[0].mxu0
    %v217 = vadd.f32 %v120, %v216
    %v218 = vpop.f32.mrb[0].mxu0
    %v219 = vpop.f32.mrb[0].mxu0
    %v220 = vadd.f32 %v120, %v219
    %v221 = vpop.f32.mrb[0].mxu0
    %222 = vdwg.mxu0
    %v223 = vmax.f32 %v193, 0.0
    %v224 = vmax.f32 %v196, 0.0
    %v225 = vmax.f32 %v201, 0.0
    %v226 = vmax.f32 %v204, 0.0
    %v227 = vmax.f32 %v209, 0.0
    %v228 = vmax.f32 %v212, 0.0
    %v229 = vmax.f32 %v217, 0.0
    %v230 = vmax.f32 %v220, 0.0
    %v231 = vpack.c.bf16 %v224, %v223
    %v232 = vpack.c.bf16 %v226, %v225
    %v233 = vpack.c.bf16 %v228, %v227
    %v234 = vpack.c.bf16 %v230, %v229
    %v235 = vld [vmem:[#allocation2] sm:$0xf]
    %v236 = vld [vmem:[#allocation2 + $0x4] sm:$0xf]
    %v237 = vld [vmem:[#allocation2 + $0x8] sm:$0xf]
    %v238 = vld [vmem:[#allocation2 + $0xc] sm:$0xf]
    %v239 = vld [vmem:[#allocation2 + $0x10] sm:$0xf]
    %v240 = vld [vmem:[#allocation2 + $0x14] sm:$0xf]
    %v241 = vld [vmem:[#allocation2 + $0x18] sm:$0xf]
    %v242 = vld [vmem:[#allocation2 + $0x1c] sm:$0xf]
    %v243 = vld [vmem:[#allocation2 + $0x20] sm:$0xf]
    %v244 = vld [vmem:[#allocation2 + $0x24] sm:$0xf]
    %v245 = vld [vmem:[#allocation2 + $0x28] sm:$0xf]
    %v246 = vld [vmem:[#allocation2 + $0x2c] sm:$0xf]
    %v247 = vld [vmem:[#allocation2 + $0x30] sm:$0xf]
    %v248 = vld [vmem:[#allocation2 + $0x34] sm:$0xf]
    %v249 = vld [vmem:[#allocation2 + $0x38] sm:$0xf]
    %v250 = vld [vmem:[#allocation2 + $0x3c] sm:$0xf]
    %v251 = vlaneseq
    %v252 = vshrl.u32 %v251, 7
    %v253 = vsub.s32 0, %v252
    %v254 = vrot.slane %v103, %v253
    %v271 = vunpack.c.l.b16 %v235
    %v272 = vunpack.c.l.b16 %v236
    %v273 = vunpack.c.l.b16 %v237
    %v274 = vunpack.c.l.b16 %v238
    %v275 = vunpack.c.l.b16 %v239
    %v276 = vunpack.c.l.b16 %v240
    %v277 = vunpack.c.l.b16 %v241
    %v278 = vunpack.c.l.b16 %v242
    %v279 = vunpack.c.l.b16 %v243
    %v280 = vunpack.c.l.b16 %v244
    %v281 = vunpack.c.l.b16 %v245
    %v282 = vunpack.c.l.b16 %v246
    %v283 = vunpack.c.l.b16 %v247
    %v284 = vunpack.c.l.b16 %v248
    %v285 = vunpack.c.l.b16 %v249
    %v286 = vunpack.c.l.b16 %v250
    %v287 = vpack.c.b16 %v272, %v271
    %v288 = vpack.c.b16 %v274, %v273
    %v289 = vpack.c.b16 %v276, %v275
    %v290 = vpack.c.b16 %v278, %v277
    %v291 = vpack.c.b16 %v280, %v279
    %v292 = vpack.c.b16 %v282, %v281
    %v293 = vpack.c.b16 %v284, %v283
    %v294 = vpack.c.b16 %v286, %v285
    %303 = vmatprep.subr.bf16.mxu0 0
    %304 = vmatpush1.bf16.msra.mxu0 %v287
    %305 = vmatprep.subr.bf16.mxu0 0
    %306 = vmatpush1.bf16.msra.mxu0 %v288
    %307 = vmatprep.subr.bf16.mxu0 0
    %308 = vmatpush1.bf16.msra.mxu0 %v289
    %309 = vmatprep.subr.bf16.mxu0 0
    %310 = vmatpush1.bf16.msra.mxu0 %v290
    %311 = vmatprep.subr.bf16.mxu0 0
    %312 = vmatpush1.bf16.msra.mxu0 %v291
    %313 = vmatprep.subr.bf16.mxu0 0
    %314 = vmatpush1.bf16.msra.mxu0 %v292
    %315 = vmatprep.subr.bf16.mxu0 0
    %316 = vmatpush1.bf16.msra.mxu0 %v293
    %317 = vmatprep.subr.bf16.mxu0 0
    %318 = vmatpush1.bf16.msra.mxu0 %v294
    %319 = vmatprep.subr.bf16.mxu0 0
    %320 = vmatpush1.bf16.msra.mxu0 0
    %321 = vmatprep.subr.bf16.mxu0 0
    %322 = vmatpush1.bf16.msra.mxu0 0
    %323 = vmatprep.subr.bf16.mxu0 0
    %324 = vmatpush1.bf16.msra.mxu0 0
    %325 = vmatprep.subr.bf16.mxu0 0
    %326 = vmatpush1.bf16.msra.mxu0 0
    %327 = vmatprep.subr.bf16.mxu0 0
    %328 = vmatpush1.bf16.msra.mxu0 0
    %329 = vmatprep.subr.bf16.mxu0 0
    %330 = vmatpush1.bf16.msra.mxu0 0
    %331 = vmatprep.subr.bf16.mxu0 0
    %332 = vmatpush1.bf16.msra.mxu0 0
    %333 = vmatprep.subr.bf16.mxu0 0
    %334 = vmatpush1.bf16.msra.mxu0 0
    %335 = vmatprep.mubr.bf16.mxu0 0
    %336 = vmatmul.mubr.bf16.gmra.mrb[0].mxu0 %v231
    %v337 = vpop.f32.mrb[0].mxu0
    %v338 = vadd.f32 %v254, %v337
    %v339 = vpop.f32.mrb[0].mxu0
    %v340 = vpop.f32.mrb[0].mxu0
    %v341 = vadd.f32 %v254, %v340
    %v342 = vpop.f32.mrb[0].mxu0
    %343 = vmatprep.mubr.bf16.mxu0 0
    %344 = vmatmul.mubr.bf16.gmra.mrb[0].mxu0 %v232
    %v345 = vpop.f32.mrb[0].mxu0
    %v346 = vadd.f32 %v254, %v345
    %v347 = vpop.f32.mrb[0].mxu0
    %v348 = vpop.f32.mrb[0].mxu0
    %v349 = vadd.f32 %v254, %v348
    %v350 = vpop.f32.mrb[0].mxu0
    %351 = vmatprep.mubr.bf16.mxu0 0
    %352 = vmatmul.mubr.bf16.gmra.mrb[0].mxu0 %v233
    %v353 = vpop.f32.mrb[0].mxu0
    %v354 = vadd.f32 %v254, %v353
    %v355 = vpop.f32.mrb[0].mxu0
    %v356 = vpop.f32.mrb[0].mxu0
    %v357 = vadd.f32 %v254, %v356
    %v358 = vpop.f32.mrb[0].mxu0
    %359 = vmatprep.mubr.bf16.mxu0 0
    %360 = vmatmul.mubr.bf16.gmra.mrb[0].mxu0 %v234
    %v361 = vpop.f32.mrb[0].mxu0
    %v362 = vadd.f32 %v254, %v361
    %v363 = vpop.f32.mrb[0].mxu0
    %v364 = vpop.f32.mrb[0].mxu0
    %v365 = vadd.f32 %v254, %v364
    %v366 = vpop.f32.mrb[0].mxu0
    %367 = vdwg.mxu0
    %v368 = vmax.f32 %v338, 0.0
    %v369 = vmax.f32 %v341, 0.0
    %v370 = vmax.f32 %v346, 0.0
    %v371 = vmax.f32 %v349, 0.0
    %v372 = vmax.f32 %v354, 0.0
    %v373 = vmax.f32 %v357, 0.0
    %v374 = vmax.f32 %v362, 0.0
    %v375 = vmax.f32 %v365, 0.0
    %v376 = vpack.c.bf16 %v369, %v368
    %v377 = vpack.c.bf16 %v371, %v370
    %v378 = vpack.c.bf16 %v373, %v372
    %v379 = vpack.c.bf16 %v375, %v374
    %v380 = vld [vmem:[#allocation5] sm:$0xf]
    %v381 = vld [vmem:[#allocation5 + $0x4] sm:$0xf]
    %v382 = vld [vmem:[#allocation5 + $0x8] sm:$0xf]
    %v383 = vld [vmem:[#allocation5 + $0xc] sm:$0xf]
    %v384 = vld [vmem:[#allocation5 + $0x10] sm:$0xf]
    %v385 = vld [vmem:[#allocation5 + $0x14] sm:$0xf]
    %v386 = vld [vmem:[#allocation5 + $0x18] sm:$0xf]
    %v387 = vld [vmem:[#allocation5 + $0x1c] sm:$0xf]
    %v388 = vld [vmem:[#allocation5 + $0x20] sm:$0xf]
    %v389 = vld [vmem:[#allocation5 + $0x24] sm:$0xf]
    %v390 = vld [vmem:[#allocation5 + $0x28] sm:$0xf]
    %v391 = vld [vmem:[#allocation5 + $0x2c] sm:$0xf]
    %v392 = vld [vmem:[#allocation5 + $0x30] sm:$0xf]
    %v393 = vld [vmem:[#allocation5 + $0x34] sm:$0xf]
    %v394 = vld [vmem:[#allocation5 + $0x38] sm:$0xf]
    %v395 = vld [vmem:[#allocation5 + $0x3c] sm:$0xf]
    %v396 = vlaneseq
    %v397 = vshrl.u32 %v396, 7
    %v398 = vsub.s32 0, %v397
    %v399 = vrot.slane %v104, %v398
    %v416 = vunpack.c.l.b16 %v380
    %v417 = vunpack.c.l.b16 %v381
    %v418 = vunpack.c.l.b16 %v382
    %v419 = vunpack.c.l.b16 %v383
    %v420 = vunpack.c.l.b16 %v384
    %v421 = vunpack.c.l.b16 %v385
    %v422 = vunpack.c.l.b16 %v386
    %v423 = vunpack.c.l.b16 %v387
    %v424 = vunpack.c.l.b16 %v388
    %v425 = vunpack.c.l.b16 %v389
    %v426 = vunpack.c.l.b16 %v390
    %v427 = vunpack.c.l.b16 %v391
    %v428 = vunpack.c.l.b16 %v392
    %v429 = vunpack.c.l.b16 %v393
    %v430 = vunpack.c.l.b16 %v394
    %v431 = vunpack.c.l.b16 %v395
    %v432 = vpack.c.b16 %v417, %v416
    %v433 = vpack.c.b16 %v419, %v418
    %v434 = vpack.c.b16 %v421, %v420
    %v435 = vpack.c.b16 %v423, %v422
    %v436 = vpack.c.b16 %v425, %v424
    %v437 = vpack.c.b16 %v427, %v426
    %v438 = vpack.c.b16 %v429, %v428
    %v439 = vpack.c.b16 %v431, %v430
    %448 = vmatprep.subr.bf16.mxu0 0
    %449 = vmatpush1.bf16.msra.mxu0 %v432
    %450 = vmatprep.subr.bf16.mxu0 0
    %451 = vmatpush1.bf16.msra.mxu0 %v433
    %452 = vmatprep.subr.bf16.mxu0 0
    %453 = vmatpush1.bf16.msra.mxu0 %v434
    %454 = vmatprep.subr.bf16.mxu0 0
    %455 = vmatpush1.bf16.msra.mxu0 %v435
    %456 = vmatprep.subr.bf16.mxu0 0
    %457 = vmatpush1.bf16.msra.mxu0 %v436
    %458 = vmatprep.subr.bf16.mxu0 0
    %459 = vmatpush1.bf16.msra.mxu0 %v437
    %460 = vmatprep.subr.bf16.mxu0 0
    %461 = vmatpush1.bf16.msra.mxu0 %v438
    %462 = vmatprep.subr.bf16.mxu0 0
    %463 = vmatpush1.bf16.msra.mxu0 %v439
    %464 = vmatprep.subr.bf16.mxu0 0
    %465 = vmatpush1.bf16.msra.mxu0 0
    %466 = vmatprep.subr.bf16.mxu0 0
    %467 = vmatpush1.bf16.msra.mxu0 0
    %468 = vmatprep.subr.bf16.mxu0 0
    %469 = vmatpush1.bf16.msra.mxu0 0
    %470 = vmatprep.subr.bf16.mxu0 0
    %471 = vmatpush1.bf16.msra.mxu0 0
    %472 = vmatprep.subr.bf16.mxu0 0
    %473 = vmatpush1.bf16.msra.mxu0 0
    %474 = vmatprep.subr.bf16.mxu0 0
    %475 = vmatpush1.bf16.msra.mxu0 0
    %476 = vmatprep.subr.bf16.mxu0 0
    %477 = vmatpush1.bf16.msra.mxu0 0
    %478 = vmatprep.subr.bf16.mxu0 0
    %479 = vmatpush1.bf16.msra.mxu0 0
    %480 = vmatprep.mubr.bf16.mxu0 0
    %481 = vmatmul.mubr.bf16.gmra.mrb[0].mxu0 %v376
    %v482 = vpop.f32.mrb[0].mxu0
    %v483 = vadd.f32 %v399, %v482
    %v484 = vpop.f32.mrb[0].mxu0
    %v485 = vpop.f32.mrb[0].mxu0
    %v486 = vadd.f32 %v399, %v485
    %v487 = vpop.f32.mrb[0].mxu0
    %488 = vmatprep.mubr.bf16.mxu0 0
    %489 = vmatmul.mubr.bf16.gmra.mrb[0].mxu0 %v377
    %v490 = vpop.f32.mrb[0].mxu0
    %v491 = vadd.f32 %v399, %v490
    %v492 = vpop.f32.mrb[0].mxu0
    %v493 = vpop.f32.mrb[0].mxu0
    %v494 = vadd.f32 %v399, %v493
    %v495 = vpop.f32.mrb[0].mxu0
    %496 = vmatprep.mubr.bf16.mxu0 0
    %497 = vmatmul.mubr.bf16.gmra.mrb[0].mxu0 %v378
    %v498 = vpop.f32.mrb[0].mxu0
    %v499 = vadd.f32 %v399, %v498
    %v500 = vpop.f32.mrb[0].mxu0
    %v501 = vpop.f32.mrb[0].mxu0
    %v502 = vadd.f32 %v399, %v501
    %v503 = vpop.f32.mrb[0].mxu0
    %504 = vmatprep.mubr.bf16.mxu0 0
    %505 = vmatmul.mubr.bf16.gmra.mrb[0].mxu0 %v379
    %v506 = vpop.f32.mrb[0].mxu0
    %v507 = vadd.f32 %v399, %v506
    %v508 = vpop.f32.mrb[0].mxu0
    %v509 = vpop.f32.mrb[0].mxu0
    %v510 = vadd.f32 %v399, %v509
    %v511 = vpop.f32.mrb[0].mxu0
    %512 = vdwg.mxu0
    %v513 = vrot.slane %v483, 4
    %v514 = vadd.f32 %v483, %v513
    %v515 = vrot.slane %v514, 2
    %v516 = vadd.f32 %v514, %v515
    %v517 = vrot.slane %v516, 1
    %v518 = vadd.f32 %v516, %v517
    %v519 = vrot.slane %v486, 4
    %v520 = vadd.f32 %v486, %v519
    %v521 = vrot.slane %v520, 2
    %v522 = vadd.f32 %v520, %v521
    %v523 = vrot.slane %v522, 1
    %v524 = vadd.f32 %v522, %v523
    %v525 = vrot.slane %v491, 4
    %v526 = vadd.f32 %v491, %v525
    %v527 = vrot.slane %v526, 2
    %v528 = vadd.f32 %v526, %v527
    %v529 = vrot.slane %v528, 1
    %v530 = vadd.f32 %v528, %v529
    %v531 = vrot.slane %v494, 4
    %v532 = vadd.f32 %v494, %v531
    %v533 = vrot.slane %v532, 2
    %v534 = vadd.f32 %v532, %v533
    %v535 = vrot.slane %v534, 1
    %v536 = vadd.f32 %v534, %v535
    %v537 = vrot.slane %v499, 4
    %v538 = vadd.f32 %v499, %v537
    %v539 = vrot.slane %v538, 2
    %v540 = vadd.f32 %v538, %v539
    %v541 = vrot.slane %v540, 1
    %v542 = vadd.f32 %v540, %v541
    %v543 = vrot.slane %v502, 4
    %v544 = vadd.f32 %v502, %v543
    %v545 = vrot.slane %v544, 2
    %v546 = vadd.f32 %v544, %v545
    %v547 = vrot.slane %v546, 1
    %v548 = vadd.f32 %v546, %v547
    %v549 = vrot.slane %v507, 4
    %v550 = vadd.f32 %v507, %v549
    %v551 = vrot.slane %v550, 2
    %v552 = vadd.f32 %v550, %v551
    %v553 = vrot.slane %v552, 1
    %v554 = vadd.f32 %v552, %v553
    %v555 = vrot.slane %v510, 4
    %v556 = vadd.f32 %v510, %v555
    %v557 = vrot.slane %v556, 2
    %v558 = vadd.f32 %v556, %v557
    %v559 = vrot.slane %v558, 1
    %v560 = vadd.f32 %v558, %v559
    %v561 = vmul.f32 %v518, 0.125
    %v562 = vmul.f32 %v524, 0.125
    %v563 = vmul.f32 %v530, 0.125
    %v564 = vmul.f32 %v536, 0.125
    %v565 = vmul.f32 %v542, 0.125
    %v566 = vmul.f32 %v548, 0.125
    %v567 = vmul.f32 %v554, 0.125
    %v568 = vmul.f32 %v560, 0.125
    %v569 = vpack.c.bf16 %v561, %v561
    %v570 = vpack.c.bf16 %v562, %v562
    %v571 = vpack.c.bf16 %v563, %v563
    %v572 = vpack.c.bf16 %v564, %v564
    %v573 = vpack.c.bf16 %v565, %v565
    %v574 = vpack.c.bf16 %v566, %v566
    %v575 = vpack.c.bf16 %v567, %v567
    %v576 = vpack.c.bf16 %v568, %v568
    %v577 = vld [vmem:[#allocation7] sm:$0xf]
    %v578 = vld [vmem:[#allocation7 + $0x4] sm:$0xf]
    %v579 = vld [vmem:[#allocation7 + $0x8] sm:$0xf]
    %v580 = vld [vmem:[#allocation7 + $0xc] sm:$0xf]
    %v581 = vld [vmem:[#allocation7 + $0x10] sm:$0xf]
    %v582 = vld [vmem:[#allocation7 + $0x14] sm:$0xf]
    %v583 = vld [vmem:[#allocation7 + $0x18] sm:$0xf]
    %v584 = vld [vmem:[#allocation7 + $0x1c] sm:$0xf]
    %v585 = vld [vmem:[#allocation7 + $0x20] sm:$0xf]
    %v586 = vld [vmem:[#allocation7 + $0x24] sm:$0xf]
    %v587 = vld [vmem:[#allocation7 + $0x28] sm:$0xf]
    %v588 = vld [vmem:[#allocation7 + $0x2c] sm:$0xf]
    %v589 = vld [vmem:[#allocation7 + $0x30] sm:$0xf]
    %v590 = vld [vmem:[#allocation7 + $0x34] sm:$0xf]
    %v591 = vld [vmem:[#allocation7 + $0x38] sm:$0xf]
    %v592 = vld [vmem:[#allocation7 + $0x3c] sm:$0xf]
    %v593 = vlaneseq
    %v594 = vshrl.u32 %v593, 7
    %v595 = vsub.s32 0, %v594
    %v596 = vrot.slane %v105, %v595
    %v605 = vunpack.c.l.b16 %v569
    %v606 = vunpack.c.l.b16 %v570
    %v607 = vunpack.c.l.b16 %v571
    %v608 = vunpack.c.l.b16 %v572
    %v609 = vunpack.c.l.b16 %v573
    %v610 = vunpack.c.l.b16 %v574
    %v611 = vunpack.c.l.b16 %v575
    %v612 = vunpack.c.l.b16 %v576
    %vm613 = vcmask 1041409
    %v614 = vsel %vm613, %v606, %v605
    %vm615 = vcmask 1042434
    %v616 = vsel %vm615, %v607, %v614
    %vm617 = vcmask 1043459
    %v618 = vsel %vm617, %v608, %v616
    %vm619 = vcmask 1044484
    %v620 = vsel %vm619, %v609, %v618
    %vm621 = vcmask 1045509
    %v622 = vsel %vm621, %v610, %v620
    %vm623 = vcmask 1046534
    %v624 = vsel %vm623, %v611, %v622
    %vm625 = vcmask 1047559
    %v626 = vsel %vm625, %v612, %v624
    %v627 = vpack.c.b16 %v626, %v626
    %v645 = vunpack.c.l.b16 %v577
    %v646 = vunpack.c.l.b16 %v578
    %v647 = vunpack.c.l.b16 %v579
    %v648 = vunpack.c.l.b16 %v580
    %v649 = vunpack.c.l.b16 %v581
    %v650 = vunpack.c.l.b16 %v582
    %v651 = vunpack.c.l.b16 %v583
    %v652 = vunpack.c.l.b16 %v584
    %v653 = vunpack.c.l.b16 %v585
    %v654 = vunpack.c.l.b16 %v586
    %v655 = vunpack.c.l.b16 %v587
    %v656 = vunpack.c.l.b16 %v588
    %v657 = vunpack.c.l.b16 %v589
    %v658 = vunpack.c.l.b16 %v590
    %v659 = vunpack.c.l.b16 %v591
    %v660 = vunpack.c.l.b16 %v592
    %v661 = vpack.c.b16 %v646, %v645
    %v662 = vpack.c.b16 %v648, %v647
    %v663 = vpack.c.b16 %v650, %v649
    %v664 = vpack.c.b16 %v652, %v651
    %v665 = vpack.c.b16 %v654, %v653
    %v666 = vpack.c.b16 %v656, %v655
    %v667 = vpack.c.b16 %v658, %v657
    %v668 = vpack.c.b16 %v660, %v659
    %677 = vmatprep.subr.bf16.mxu0 0
    %678 = vmatpush1.bf16.msra.mxu0 %v661
    %679 = vmatprep.subr.bf16.mxu0 0
    %680 = vmatpush1.bf16.msra.mxu0 %v662
    %681 = vmatprep.subr.bf16.mxu0 0
    %682 = vmatpush1.bf16.msra.mxu0 %v663
    %683 = vmatprep.subr.bf16.mxu0 0
    %684 = vmatpush1.bf16.msra.mxu0 %v664
    %685 = vmatprep.subr.bf16.mxu0 0
    %686 = vmatpush1.bf16.msra.mxu0 %v665
    %687 = vmatprep.subr.bf16.mxu0 0
    %688 = vmatpush1.bf16.msra.mxu0 %v666
    %689 = vmatprep.subr.bf16.mxu0 0
    %690 = vmatpush1.bf16.msra.mxu0 %v667
    %691 = vmatprep.subr.bf16.mxu0 0
    %692 = vmatpush1.bf16.msra.mxu0 %v668
    %693 = vmatprep.subr.bf16.mxu0 0
    %694 = vmatpush1.bf16.msra.mxu0 0
    %695 = vmatprep.subr.bf16.mxu0 0
    %696 = vmatpush1.bf16.msra.mxu0 0
    %697 = vmatprep.subr.bf16.mxu0 0
    %698 = vmatpush1.bf16.msra.mxu0 0
    %699 = vmatprep.subr.bf16.mxu0 0
    %700 = vmatpush1.bf16.msra.mxu0 0
    %701 = vmatprep.subr.bf16.mxu0 0
    %702 = vmatpush1.bf16.msra.mxu0 0
    %703 = vmatprep.subr.bf16.mxu0 0
    %704 = vmatpush1.bf16.msra.mxu0 0
    %705 = vmatprep.subr.bf16.mxu0 0
    %706 = vmatpush1.bf16.msra.mxu0 0
    %707 = vmatprep.subr.bf16.mxu0 0
    %708 = vmatpush1.bf16.msra.mxu0 0
    %709 = vmatprep.mubr.bf16.mxu0 0
    %710 = vmatmul.mubr.bf16.gmra.mrb[0].mxu0 %v627
    %v711 = vpop.f32.mrb[0].mxu0
    %v712 = vadd.f32 %v596, %v711
    %v713 = vpop.f32.mrb[0].mxu0
    %v714 = vpop.f32.mrb[0].mxu0
    %v715 = vpop.f32.mrb[0].mxu0
    %716 = vdwg.mxu0
    %v717 = vmax.f32 %v712, 0.0
    %v718 = vpack.c.bf16 %v717, %v717
    %v719 = vld [vmem:[#allocation8] sm:$0xf]
    %v720 = vld [vmem:[#allocation8 + $0x4] sm:$0xf]
    %v721 = vld [vmem:[#allocation8 + $0x8] sm:$0xf]
    %v722 = vld [vmem:[#allocation8 + $0xc] sm:$0xf]
    %v723 = vld [vmem:[#allocation8 + $0x10] sm:$0xf]
    %v724 = vld [vmem:[#allocation8 + $0x14] sm:$0xf]
    %v725 = vld [vmem:[#allocation8 + $0x18] sm:$0xf]
    %v726 = vld [vmem:[#allocation8 + $0x1c] sm:$0xf]
    %v727 = vld [vmem:[#allocation8 + $0x20] sm:$0xf]
    %v728 = vld [vmem:[#allocation8 + $0x24] sm:$0xf]
    %v729 = vld [vmem:[#allocation8 + $0x28] sm:$0xf]
    %v730 = vld [vmem:[#allocation8 + $0x2c] sm:$0xf]
    %v731 = vld [vmem:[#allocation8 + $0x30] sm:$0xf]
    %v732 = vld [vmem:[#allocation8 + $0x34] sm:$0xf]
    %v733 = vld [vmem:[#allocation8 + $0x38] sm:$0xf]
    %v734 = vld [vmem:[#allocation8 + $0x3c] sm:$0xf]
    %v735 = vlaneseq
    %v736 = vshrl.u32 %v735, 7
    %v737 = vsub.s32 0, %v736
    %v738 = vrot.slane %v106, %v737
    %v755 = vunpack.c.l.b16 %v719
    %v756 = vunpack.c.l.b16 %v720
    %v757 = vunpack.c.l.b16 %v721
    %v758 = vunpack.c.l.b16 %v722
    %v759 = vunpack.c.l.b16 %v723
    %v760 = vunpack.c.l.b16 %v724
    %v761 = vunpack.c.l.b16 %v725
    %v762 = vunpack.c.l.b16 %v726
    %v763 = vunpack.c.l.b16 %v727
    %v764 = vunpack.c.l.b16 %v728
    %v765 = vunpack.c.l.b16 %v729
    %v766 = vunpack.c.l.b16 %v730
    %v767 = vunpack.c.l.b16 %v731
    %v768 = vunpack.c.l.b16 %v732
    %v769 = vunpack.c.l.b16 %v733
    %v770 = vunpack.c.l.b16 %v734
    %v771 = vpack.c.b16 %v756, %v755
    %v772 = vpack.c.b16 %v758, %v757
    %v773 = vpack.c.b16 %v760, %v759
    %v774 = vpack.c.b16 %v762, %v761
    %v775 = vpack.c.b16 %v764, %v763
    %v776 = vpack.c.b16 %v766, %v765
    %v777 = vpack.c.b16 %v768, %v767
    %v778 = vpack.c.b16 %v770, %v769
    %787 = vmatprep.subr.bf16.mxu0 0
    %788 = vmatpush1.bf16.msra.mxu0 %v771
    %789 = vmatprep.subr.bf16.mxu0 0
    %790 = vmatpush1.bf16.msra.mxu0 %v772
    %791 = vmatprep.subr.bf16.mxu0 0
    %792 = vmatpush1.bf16.msra.mxu0 %v773
    %793 = vmatprep.subr.bf16.mxu0 0
    %794 = vmatpush1.bf16.msra.mxu0 %v774
    %795 = vmatprep.subr.bf16.mxu0 0
    %796 = vmatpush1.bf16.msra.mxu0 %v775
    %797 = vmatprep.subr.bf16.mxu0 0
    %798 = vmatpush1.bf16.msra.mxu0 %v776
    %799 = vmatprep.subr.bf16.mxu0 0
    %800 = vmatpush1.bf16.msra.mxu0 %v777
    %801 = vmatprep.subr.bf16.mxu0 0
    %802 = vmatpush1.bf16.msra.mxu0 %v778
    %803 = vmatprep.subr.bf16.mxu0 0
    %804 = vmatpush1.bf16.msra.mxu0 0
    %805 = vmatprep.subr.bf16.mxu0 0
    %806 = vmatpush1.bf16.msra.mxu0 0
    %807 = vmatprep.subr.bf16.mxu0 0
    %808 = vmatpush1.bf16.msra.mxu0 0
    %809 = vmatprep.subr.bf16.mxu0 0
    %810 = vmatpush1.bf16.msra.mxu0 0
    %811 = vmatprep.subr.bf16.mxu0 0
    %812 = vmatpush1.bf16.msra.mxu0 0
    %813 = vmatprep.subr.bf16.mxu0 0
    %814 = vmatpush1.bf16.msra.mxu0 0
    %815 = vmatprep.subr.bf16.mxu0 0
    %816 = vmatpush1.bf16.msra.mxu0 0
    %817 = vmatprep.subr.bf16.mxu0 0
    %818 = vmatpush1.bf16.msra.mxu0 0
    %819 = vmatprep.mubr.bf16.mxu0 0
    %820 = vmatmul.mubr.bf16.gmra.mrb[0].mxu0 %v718
    %v821 = vpop.f32.mrb[0].mxu0
    %v822 = vadd.f32 %v738, %v821
    %v823 = vpop.f32.mrb[0].mxu0
    %v824 = vpop.f32.mrb[0].mxu0
    %v825 = vpop.f32.mrb[0].mxu0
    %826 = vdwg.mxu0
    %v827 = vld [vmem:[#allocation10] sm:$0xf]
    %v828 = vld [vmem:[#allocation10 + $0x4] sm:$0xf]
    %v829 = vld [vmem:[#allocation10 + $0x8] sm:$0xf]
    %v830 = vld [vmem:[#allocation10 + $0xc] sm:$0xf]
    %v831 = vld [vmem:[#allocation10 + $0x10] sm:$0xf]
    %v832 = vld [vmem:[#allocation10 + $0x14] sm:$0xf]
    %v833 = vld [vmem:[#allocation10 + $0x18] sm:$0xf]
    %v834 = vld [vmem:[#allocation10 + $0x1c] sm:$0xf]
    %v835 = vld [vmem:[#allocation10 + $0x20] sm:$0xf]
    %v836 = vld [vmem:[#allocation10 + $0x24] sm:$0xf]
    %v837 = vld [vmem:[#allocation10 + $0x28] sm:$0xf]
    %v838 = vld [vmem:[#allocation10 + $0x2c] sm:$0xf]
    %v839 = vld [vmem:[#allocation10 + $0x30] sm:$0xf]
    %v840 = vld [vmem:[#allocation10 + $0x34] sm:$0xf]
    %v841 = vld [vmem:[#allocation10 + $0x38] sm:$0xf]
    %v842 = vld [vmem:[#allocation10 + $0x3c] sm:$0xf]
    %v843 = vlaneseq
    %v844 = vshrl.u32 %v843, 7
    %v845 = vsub.s32 0, %v844
    %v846 = vrot.slane %v107, %v845
    %v863 = vunpack.c.l.b16 %v827
    %v864 = vunpack.c.l.b16 %v828
    %v865 = vunpack.c.l.b16 %v829
    %v866 = vunpack.c.l.b16 %v830
    %v867 = vunpack.c.l.b16 %v831
    %v868 = vunpack.c.l.b16 %v832
    %v869 = vunpack.c.l.b16 %v833
    %v870 = vunpack.c.l.b16 %v834
    %v871 = vunpack.c.l.b16 %v835
    %v872 = vunpack.c.l.b16 %v836
    %v873 = vunpack.c.l.b16 %v837
    %v874 = vunpack.c.l.b16 %v838
    %v875 = vunpack.c.l.b16 %v839
    %v876 = vunpack.c.l.b16 %v840
    %v877 = vunpack.c.l.b16 %v841
    %v878 = vunpack.c.l.b16 %v842
    %v879 = vpack.c.b16 %v864, %v863
    %v880 = vpack.c.b16 %v866, %v865
    %v881 = vpack.c.b16 %v868, %v867
    %v882 = vpack.c.b16 %v870, %v869
    %v883 = vpack.c.b16 %v872, %v871
    %v884 = vpack.c.b16 %v874, %v873
    %v885 = vpack.c.b16 %v876, %v875
    %v886 = vpack.c.b16 %v878, %v877
    %895 = vmatprep.subr.bf16.mxu0 0
    %896 = vmatpush1.bf16.msra.mxu0 %v879
    %897 = vmatprep.subr.bf16.mxu0 0
    %898 = vmatpush1.bf16.msra.mxu0 %v880
    %899 = vmatprep.subr.bf16.mxu0 0
    %900 = vmatpush1.bf16.msra.mxu0 %v881
    %901 = vmatprep.subr.bf16.mxu0 0
    %902 = vmatpush1.bf16.msra.mxu0 %v882
    %903 = vmatprep.subr.bf16.mxu0 0
    %904 = vmatpush1.bf16.msra.mxu0 %v883
    %905 = vmatprep.subr.bf16.mxu0 0
    %906 = vmatpush1.bf16.msra.mxu0 %v884
    %907 = vmatprep.subr.bf16.mxu0 0
    %908 = vmatpush1.bf16.msra.mxu0 %v885
    %909 = vmatprep.subr.bf16.mxu0 0
    %910 = vmatpush1.bf16.msra.mxu0 %v886
    %911 = vmatprep.subr.bf16.mxu0 0
    %912 = vmatpush1.bf16.msra.mxu0 0
    %913 = vmatprep.subr.bf16.mxu0 0
    %914 = vmatpush1.bf16.msra.mxu0 0
    %915 = vmatprep.subr.bf16.mxu0 0
    %916 = vmatpush1.bf16.msra.mxu0 0
    %917 = vmatprep.subr.bf16.mxu0 0
    %918 = vmatpush1.bf16.msra.mxu0 0
    %919 = vmatprep.subr.bf16.mxu0 0
    %920 = vmatpush1.bf16.msra.mxu0 0
    %921 = vmatprep.subr.bf16.mxu0 0
    %922 = vmatpush1.bf16.msra.mxu0 0
    %923 = vmatprep.subr.bf16.mxu0 0
    %924 = vmatpush1.bf16.msra.mxu0 0
    %925 = vmatprep.subr.bf16.mxu0 0
    %926 = vmatpush1.bf16.msra.mxu0 0
    %927 = vmatprep.mubr.bf16.mxu0 0
    %928 = vmatmul.mubr.bf16.gmra.mrb[0].mxu0 %v718
    %v929 = vpop.f32.mrb[0].mxu0
    %v930 = vadd.f32 %v846, %v929
    %v931 = vpop.f32.mrb[0].mxu0
    %v932 = vpop.f32.mrb[0].mxu0
    %v933 = vpop.f32.mrb[0].mxu0
    %934 = vdwg.mxu0
    %v935 = vmul.f32 %v930, 0.5
    %v936 = vxor.u32 %v935, 2147483648
    %v937 = vmul.f32 %v936, 1.442695
    %v938 = vpow.pop %v937
    %v939 = vadd.f32 %v938, 1.0
    %v940 = vrcp.pop %v939
    %v941 = vmul.f32 1.0, %v940
    %v942 = vmul.f32 %v941, 0.99
    %v943 = vadd.f32 %v942, 0.01
    %944 = vst [vmem:[#allocation11] sm:$0xff] %v822
    %945 = vst [vmem:[#allocation11 + $0x8] sm:$0xff] %v930
    %946 = vst [vmem:[#allocation11 + $0x10] sm:$0xff] %v943
    // Predicated region
    $region58: #{tpu_custom_call.1} parent=1 // pred_check
      _
    $region59: #{tpu_custom_call.1} parent=1 // pred_check_branch
      %948 = sbr.rel (0) target = $region61
    $region60: #{tpu_custom_call.1} parent=1 // pred_region
      %s950 = ssub.s32 384, 384
      %951 = vsyncadd [#allocation4], %s950
      %s953 = sshll.u32 [#allocation11], 4
      %s954 = int_to_ptr.vmem [resolvable:$true] %s953
      %956 = dma.vmem_to_hbm [thread:$0]  %s954, 384, %s9, [#allocation4]
    $region61: #{tpu_custom_call.1} parent=1 // pred_fallthru
      _
    // Predicated region
    $region62: #{tpu_custom_call.1} parent=1 // pred_check
      _
    $region63: #{tpu_custom_call.1} parent=1 // pred_check_branch
      %958 = sbr.rel (0) target = $region65
    $region64: #{tpu_custom_call.1} parent=1 // pred_region
      %959 = dma.done [#allocation4], 384
    $region65: #{tpu_custom_call.1} parent=1 // pred_fallthru
      _
    %960 = vsyncpa [#allocation3], 1
    %961 = vsyncpa [#allocation6], 1
    %962 = vsyncpa [#allocation9], 1
    %963 = vsyncpa [#allocation4], 1

</llo_original>
